<compile_context>
chip_gen: v7x
topology: tpu7x:2x2x1
jax: 0.10.0
libtpu: 0.0.40
codegen_flags: <defaults>
</compile_context>

<pallas_src>
import functools

import jax
import jax.numpy as jnp
from jax import lax
from jax.experimental import pallas as pl
from jax.experimental.pallas import tpu as pltpu


# ----------------------------------------------------------------------------
# Kernels
# ----------------------------------------------------------------------------
def _patch_expand_fused_kernel(x_ref, w_ref, b_ref, o_ref, *, th, p, W, pc):
    """Fused linear expand + pixel shuffle for one M-tile.

    x_ref: (tm, C)          activation rows (th rows of B*H, all W columns)
    w_ref: (C, N)           weight pre-transposed, VMEM-resident
    b_ref: (1, N)           bias, VMEM-resident
    o_ref: (th, p, W, pc)   pixel-shuffled output block, pc = p * output_dim
    """
    x = x_ref[...]
    for p1 in range(p):
        lo = p1 * pc
        hi = lo + pc
        # (tm, C) x (C, pc) -> (tm, pc), f32 accumulation on the MXU.
        acc = lax.dot_general(
            x, w_ref[:, lo:hi],
            dimension_numbers=(((1,), (0,)), ((), ())),
            preferred_element_type=jnp.float32,
        )
        y = (acc + b_ref[:, lo:hi]).astype(o_ref.dtype)
        # Row t*W + w of y maps to output [t, p1, w, :]; reshape is free when
        # W is sublane-aligned, and the store is a single lane-dense slab.
        o_ref[:, p1:p1 + 1, :, :] = y.reshape(th, 1, W, pc)


def _linear_kernel(x_ref, w_ref, b_ref, o_ref):
    """Fallback: plain lane-dense linear (pixel shuffle done outside in XLA)."""
    acc = lax.dot_general(
        x_ref[...], w_ref[...],
        dimension_numbers=(((1,), (0,)), ((), ())),
        preferred_element_type=jnp.float32,
    )
    o_ref[...] = (acc + b_ref[...]).astype(o_ref.dtype)


# ----------------------------------------------------------------------------
# Tiling helpers
# ----------------------------------------------------------------------------
def _vmem_capacity_bytes():
    """Per-TensorCore VMEM capacity; conservative default if query fails."""
    try:
        info = pltpu.get_tpu_info()
        cap = getattr(info, "vmem_capacity_bytes", None)
        if cap:
            return int(cap)
    except Exception:
        pass
    return 64 * 1024 * 1024  # v7x per-TC (smallest modern config)


def _choose_th(BH, W, C, N, acc_w, itemsize, *, target_rows, vmem_budget,
               min_steps, sublane):
    """Pick th (rows of B*H per grid step); matmul tile is tm = th*W rows."""
    def est(t):
        tm = t * W
        # x double-buffered + weight (counted double-buffered to be safe)
        # + bias + output double-buffered + live f32 accumulator slab.
        return ((2 * tm * C + 2 * N * C + 2 * N + 2 * tm * N) * itemsize
                + tm * acc_w * (4 + itemsize))

    divisors = [t for t in range(1, BH + 1) if BH % t == 0]
    aligned = [t for t in divisors if (t * W) % sublane == 0 or t == BH]
    cands = aligned if aligned else divisors

    good = [t for t in cands if t * W <= target_rows and est(t) <= vmem_budget]
    multi = [t for t in good if BH // t >= min_steps]   # keep pipeline + megacore fed
    if multi:
        return max(multi)
    if good:
        return max(good)
    fits = [t for t in cands if est(t) <= vmem_budget]
    if fits:
        return min(fits)
    return min(cands)                                    # correctness fallback


# ----------------------------------------------------------------------------
# Wrapper
# ----------------------------------------------------------------------------
def patch_expand(x, H, W, weight, bias, output_dim, scale_factor=2,
                 block_rows=1024, min_steps=4):
    """Forward pass equivalent to PatchExpand.forward(x, H, W).

    x:      (B, L, C) with L == H*W
    weight: (output_dim * scale_factor**2, C)  -- native PyTorch nn.Linear layout
    bias:   (output_dim * scale_factor**2,)
    Returns (y, H*scale, W*scale) with y of shape (B, H*scale*W*scale, output_dim).
    """
    B, L, C = x.shape
    assert L == H * W, f"Input feature has wrong size: {L} vs {H * W}"
    p = scale_factor
    pc = p * output_dim
    N = p * pc                                   # output_dim * scale_factor**2
    assert weight.shape == (N, C), (weight.shape, (N, C))
    assert bias.shape == (N,)

    BH = B * H
    M = BH * W
    itemsize = jnp.dtype(x.dtype).itemsize
    sublane = max(8, 32 // max(itemsize, 1))     # 8 for f32, 16 for bf16

    vmem_cap = _vmem_capacity_bytes()
    vmem_budget = int(0.45 * vmem_cap)           # per-step footprint target
    vmem_limit_cap = int(0.85 * vmem_cap)        # never request all of VMEM

    x2d = x.reshape(M, C)                        # contiguous, free
    w2 = weight.T                                # one-time (N,C)->(C,N) copy
    b2 = bias.reshape(1, N)

    flops = 2 * M * C * N
    bytes_accessed = (M * C + N * C + N + M * N) * itemsize

    use_fused = (pc % 128 == 0)                  # lane-dense output stores

    if use_fused:
        th = _choose_th(BH, W, C, N, pc, itemsize,
                        target_rows=block_rows, vmem_budget=vmem_budget,
                        min_steps=min_steps, sublane=sublane)
        tm = th * W
        grid = (BH // th,)
        est_bytes = ((2 * tm * C + 2 * N * C + 2 * N + 2 * tm * N) * itemsize
                     + tm * pc * (4 + itemsize))
        vmem_limit = int(min(max(2 * est_bytes, 32 * 1024 * 1024),
                             vmem_limit_cap))

        kernel = functools.partial(_patch_expand_fused_kernel,
                                   th=th, p=p, W=W, pc=pc)
        out4 = pl.pallas_call(
            kernel,
            out_shape=jax.ShapeDtypeStruct((BH, p, W, pc), x.dtype),
            grid_spec=pltpu.PrefetchScalarGridSpec(
                num_scalar_prefetch=0,
                grid=grid,
                in_specs=[
                    pl.BlockSpec((tm, C), lambda i: (i, 0)),   # x tile (pipelined)
                    pl.BlockSpec((C, N), lambda i: (0, 0)),    # weight, resident
                    pl.BlockSpec((1, N), lambda i: (0, 0)),    # bias, resident
                ],
                out_specs=pl.BlockSpec((th, p, W, pc), lambda i: (i, 0, 0, 0)),
            ),
            compiler_params=pltpu.CompilerParams(
                dimension_semantics=("parallel",),
                vmem_limit_bytes=vmem_limit,
            ),
            cost_estimate=pl.CostEstimate(
                flops=flops, transcendentals=0, bytes_accessed=bytes_accessed),
        )(x2d, w2, b2)

        # (B*H, p1, W, p2*c) flattens contiguously to b (h p1) (w p2) c.
        y = out4.reshape(B, H * p * W * p, output_dim)
        return y, H * p, W * p

    # ------------------------------------------------------------------
    # Fallback (pc not a multiple of 128): lane-dense (tm, N) linear kernel,
    # pixel shuffle done as an XLA reshape/transpose outside the kernel.
    # ------------------------------------------------------------------
    tm = _choose_th(M, 1, C, N, N, itemsize,
                    target_rows=block_rows, vmem_budget=vmem_budget,
                    min_steps=min_steps, sublane=sublane)
    grid = (M // tm,)
    est_bytes = ((2 * tm * C + 2 * N * C + 2 * N + 2 * tm * N) * itemsize
                 + tm * N * (4 + itemsize))
    vmem_limit = int(min(max(2 * est_bytes, 32 * 1024 * 1024), vmem_limit_cap))

    out2d = pl.pallas_call(
        _linear_kernel,
        out_shape=jax.ShapeDtypeStruct((M, N), x.dtype),
        grid_spec=pltpu.PrefetchScalarGridSpec(
            num_scalar_prefetch=0,
            grid=grid,
            in_specs=[
                pl.BlockSpec((tm, C), lambda i: (i, 0)),
                pl.BlockSpec((C, N), lambda i: (0, 0)),
                pl.BlockSpec((1, N), lambda i: (0, 0)),
            ],
            out_specs=pl.BlockSpec((tm, N), lambda i: (i, 0)),
        ),
        compiler_params=pltpu.CompilerParams(
            dimension_semantics=("parallel",),
            vmem_limit_bytes=vmem_limit,
        ),
        cost_estimate=pl.CostEstimate(
            flops=flops, transcendentals=0, bytes_accessed=bytes_accessed),
    )(x2d, w2, b2)

    y = out2d.reshape(B, H, W, p, p, output_dim)
    y = jnp.transpose(y, (0, 1, 3, 2, 4, 5)).reshape(B, H * p * W * p, output_dim)
    return y, H * p, W * p


# ----------------------------------------------------------------------------
# Test
# ----------------------------------------------------------------------------
if __name__ == "__main__":
    key = jax.random.PRNGKey(0)
    k_x, k_w, k_b = jax.random.split(key, 3)

    # Small but lane-friendly shapes: M = B*H*W = 512 rows -> 4 grid steps,
    # output lane dim p*output_dim = 128 (dense, unmasked stores).
    B, H, W = 2, 16, 16
    input_dim, output_dim, scale = 128, 64, 2
    L = H * W
    N = output_dim * scale * scale

    x = jax.random.normal(k_x, (B, L, input_dim), dtype=jnp.float32)
    weight = jax.random.normal(k_w, (N, input_dim), dtype=jnp.float32) * 0.02
    bias = jax.random.normal(k_b, (N,), dtype=jnp.float32) * 0.02

    y, H2, W2 = patch_expand(x, H, W, weight, bias, output_dim, scale)
    y = jax.block_until_ready(y)

    # Pure-JAX reference (same math as the PyTorch module).
    ref = x @ weight.T + bias
    ref = ref.reshape(B, H, W, scale, scale, output_dim)
    ref = jnp.transpose(ref, (0, 1, 3, 2, 4, 5)).reshape(
        B, H * scale * W * scale, output_dim)

    assert y.shape == (B, H * scale * W * scale, output_dim)
    assert H2 == H * scale and W2 == W * scale
    assert jnp.allclose(y, ref, atol=1e-4, rtol=1e-4)

    print("KERNEL_OK")
</pallas_src>

<mosaic_0001>
module attributes {stable_mosaic.version = 11 : i64} {
  func.func @_patch_expand_fused_kernel(%arg0: i32, %arg1: memref<128x128xf32, #tpu.memory_space<vmem>>, %arg2: memref<128x256xf32, #tpu.memory_space<vmem>>, %arg3: memref<1x256xf32, #tpu.memory_space<vmem>>, %arg4: memref<8x2x16x128xf32, #tpu.memory_space<vmem>>) attributes {dimension_semantics = [#tpu.dimension_semantics<parallel>], iteration_bounds = array<i64: 4>, scalar_prefetch = 0 : i64, scratch_operands = 0 : i64, tpu.core_type = #tpu.core_type<tc>, window_params = [{transform_indices = @transform_0, window_bounds = array<i64: 128, 128>}, {pipeline_mode = #tpu.pipeline_mode<synchronous>, transform_indices = @transform_1, window_bounds = array<i64: 128, 256>}, {pipeline_mode = #tpu.pipeline_mode<synchronous>, transform_indices = @transform_2, window_bounds = array<i64: 1, 256>}, {transform_indices = @transform_3, window_bounds = array<i64: 8, 2, 16, 128>}]} {
    %c0 = arith.constant 0 : index
    %c0_0 = arith.constant 0 : index
    %0 = vector.load %arg1[%c0, %c0_0] : memref<128x128xf32, #tpu.memory_space<vmem>>, vector<128x128xf32>
    %c0_1 = arith.constant 0 : index
    %c0_2 = arith.constant 0 : index
    %1 = vector.load %arg2[%c0_1, %c0_2] : memref<128x256xf32, #tpu.memory_space<vmem>>, vector<128x128xf32>
    %cst = arith.constant dense<0.000000e+00> : vector<128x128xf32>
    %2 = tpu.matmul %0, %1, %cst {dimension_numbers = #tpu.dot_dimension_numbers<[1], [0], [0], [1], [0, 0, 1, 1], [], []>} : vector<128x128xf32>, vector<128x128xf32>, vector<128x128xf32> -> vector<128x128xf32>
    %c0_3 = arith.constant 0 : index
    %c0_4 = arith.constant 0 : index
    %3 = vector.load %arg3[%c0_3, %c0_4] : memref<1x256xf32, #tpu.memory_space<vmem>>, vector<1x128xf32>
    %4 = vector.broadcast %3 : vector<1x128xf32> to vector<128x128xf32>
    %5 = arith.addf %2, %4 : vector<128x128xf32>
    %6 = vector.shape_cast %5 : vector<128x128xf32> to vector<8x1x16x128xf32>
    %c0_5 = arith.constant 0 : index
    %c0_6 = arith.constant 0 : index
    %c0_7 = arith.constant 0 : index
    %c0_8 = arith.constant 0 : index
    %7 = vector.load %arg4[%c0_5, %c0_6, %c0_7, %c0_8] : memref<8x2x16x128xf32, #tpu.memory_space<vmem>>, vector<8x1x16x128xf32>
    tpu.vector_store %arg4[%c0_5, %c0_6, %c0_7, %c0_8], %6 {strides = array<i32>} : memref<8x2x16x128xf32, #tpu.memory_space<vmem>>, vector<8x1x16x128xf32>,
    %c0_9 = arith.constant 0 : index
    %c128 = arith.constant 128 : index
    %8 = vector.load %arg2[%c0_9, %c128] : memref<128x256xf32, #tpu.memory_space<vmem>>, vector<128x128xf32>
    %cst_10 = arith.constant dense<0.000000e+00> : vector<128x128xf32>
    %9 = tpu.matmul %0, %8, %cst_10 {dimension_numbers = #tpu.dot_dimension_numbers<[1], [0], [0], [1], [0, 0, 1, 1], [], []>} : vector<128x128xf32>, vector<128x128xf32>, vector<128x128xf32> -> vector<128x128xf32>
    %c0_11 = arith.constant 0 : index
    %c128_12 = arith.constant 128 : index
    %10 = vector.load %arg3[%c0_11, %c128_12] : memref<1x256xf32, #tpu.memory_space<vmem>>, vector<1x128xf32>
    %11 = vector.broadcast %10 : vector<1x128xf32> to vector<128x128xf32>
    %12 = arith.addf %9, %11 : vector<128x128xf32>
    %13 = vector.shape_cast %12 : vector<128x128xf32> to vector<8x1x16x128xf32>
    %c0_13 = arith.constant 0 : index
    %c1 = arith.constant 1 : index
    %c0_14 = arith.constant 0 : index
    %c0_15 = arith.constant 0 : index
    %14 = vector.load %arg4[%c0_13, %c1, %c0_14, %c0_15] : memref<8x2x16x128xf32, #tpu.memory_space<vmem>>, vector<8x1x16x128xf32>
    tpu.vector_store %arg4[%c0_13, %c1, %c0_14, %c0_15], %13 {strides = array<i32>} : memref<8x2x16x128xf32, #tpu.memory_space<vmem>>, vector<8x1x16x128xf32>,
    return
  }
  func.func @transform_0(%arg0: i32) -> (i32, i32) {
    %c0_i32 = arith.constant 0 : i32
    %c0_i32_0 = arith.constant 0 : i32
    return %arg0, %c0_i32 : i32, i32
  }
  func.func @transform_1(%arg0: i32) -> (i32, i32) {
    %c0_i32 = arith.constant 0 : i32
    %c0_i32_0 = arith.constant 0 : i32
    %c0_i32_1 = arith.constant 0 : i32
    return %c0_i32, %c0_i32_0 : i32, i32
  }
  func.func @transform_2(%arg0: i32) -> (i32, i32) {
    %c0_i32 = arith.constant 0 : i32
    %c0_i32_0 = arith.constant 0 : i32
    %c0_i32_1 = arith.constant 0 : i32
    return %c0_i32, %c0_i32_0 : i32, i32
  }
  func.func @transform_3(%arg0: i32) -> (i32, i32, i32, i32) {
    %c0_i32 = arith.constant 0 : i32
    %c0_i32_0 = arith.constant 0 : i32
    %c0_i32_1 = arith.constant 0 : i32
    %c0_i32_2 = arith.constant 0 : i32
    return %arg0, %c0_i32, %c0_i32_0, %c0_i32_1 : i32, i32, i32, i32
  }
}

</mosaic_0001>

<llo_original>
// kernel: tpu_custom_call.1
$region0: #{tpu_custom_call.1}
  #allocation0 [shape = 'u32[]', space=smem, size = 0x4, offset = 0x4, fixed_abs, tag = 'smem constant byte address 0x4 - core index']
  #allocation1 [shape = 'u32[144,128]{1,0:T(1,128)}', space=vmem, size = 0x12000, scoped, tag = 'internal scratch']
  %s0 = inlined_call_operand.hbm [shape: f32[512,128], index: 0, kind: input, shape index: {}]
  %s1 = inlined_call_operand.hbm [shape: f32[128,256], index: 1, kind: input, shape index: {}]
  %s2 = inlined_call_operand.vmem [shape: f32[1,256], index: 2, kind: input, shape index: {}]
  %s3 = inlined_call_operand.hbm [shape: f32[32,2,16,128], index: 3, kind: output, shape index: {}]
  %s4 = sld [smem:[#allocation0]]
  $region53: #{tpu_custom_call.1} parent=0
    _
  %s6 = ssub.s32 1, %s4
  %s7 = scalar_select 0, %s6, %s4
  $region1: #{tpu_custom_call.1} parent=0
    #allocation2 [shape = 'u8[131072]{0}', space=vmem, size = 0x20000, scoped, tag = 'input window, operand 0']
    #allocation3 [shape = 's32[2]{0}', space=sflag, size = 0x8, scoped, tag = 'scoped memory for tpu_custom_call.1']
    #allocation4 [shape = 's32[2]{0}', space=sflag, size = 0x8, scoped, tag = 'scoped memory for tpu_custom_call.1']
    #allocation5 [shape = 'u8[131072]{0}', space=vmem, size = 0x20000, scoped, tag = 'input window, operand 1, single buffered']
    #allocation6 [shape = 's32[1]{0}', space=sflag, size = 0x4, scoped, tag = 'scoped memory for tpu_custom_call.1']
    #allocation7 [shape = 'u8[262144]{0}', space=vmem, size = 0x40000, scoped, tag = 'output window, operand 0']
    %8 = vsyncpa [#allocation3], 0
    %s9 = scalar_lea.sflag [#allocation3], 1
    %10 = vsyncpa %s9, 0
    %11 = vsyncpa [#allocation6], 0
    %12 = vsyncpa [#allocation4], 0
    %s13 = scalar_lea.sflag [#allocation4], 1
    %14 = vsyncpa %s13, 0
    loop: start=0, step=1, limit=6
    $region2: #{tpu_custom_call.1} parent=1 // loop_pre_header
      _
    $region3: #{tpu_custom_call.1} parent=1 // loop_header
      %s16 = sphi 0, %s20
      %p17 = scmp.ge.s32.totalorder %s16, 6
      %s26 = sphi 0, %s28
      %s29 = sphi 0, %s26
      %s30 = sphi 0, %s29
      %s46 = sphi 0, %s30
      %s50 = sphi 0, %s50
      %s52 = sphi 0, %s50
      %s53 = sphi 0, %s52
      %s67 = sphi 0, %s53
      %s71 = sphi 0, %s71
      %s73 = sphi 0, %s71
      %s74 = sphi 0, %s73
      %s88 = sphi 0, %s74
      %s94 = sphi 0, %s96
      %s97 = sphi 0, %s94
      %s98 = sphi 0, %s97
      %s114 = sphi 0, %s98
    $region4: #{tpu_custom_call.1} parent=1 // loop_header_branch
      %19 = sbr.rel (%p17) target = $region8
    $region5: #{tpu_custom_call.1} parent=1 // loop_body
      %s21 = ssub.s32 %s16, 1
      %s22 = ssub.s32 %s16, 2
      %s23 = sadd.s32 %s16, 1
      %s24 = ssub.s32 %s16, %s23
      %p25 = scmp.eq.s32.totalorder %s24, 0
      %s27 = sadd.s32 %s26, 1
      %s28 = scalar_select %p25, %s26, %s27
      %p31 = pneg %p25
      %p32 = scmp.eq.s32.totalorder %s16, 3
      %p33 = por %p31, %p32
      %p34 = scmp.ne.s32.totalorder %s26, %s29
      %p35 = scmp.eq.s32.totalorder %s16, 0
      %p36 = por %p34, %p35
      %p37 = scmp.ne.s32.totalorder %s26, %s29
      %p38 = scmp.eq.s32.totalorder %s21, 3
      %p39 = por %p37, %p38
      %p40 = scmp.ne.s32.totalorder %s29, %s30
      %p41 = scmp.eq.s32.totalorder %s21, 0
      %p42 = por %p40, %p41
      %p43 = scmp.ne.s32.totalorder %s29, %s30
      %p44 = scmp.eq.s32.totalorder %s22, 3
      %p45 = por %p43, %p44
      %p47 = scmp.ne.s32.totalorder %s30, %s46
      %p48 = scmp.eq.s32.totalorder %s22, 0
      %p49 = por %p47, %p48
      %s51 = sadd.s32 %s50, 1
      %p54 = scmp.eq.s32.totalorder %s16, 3
      %p55 = scmp.ne.s32.totalorder %s50, %s52
      %p56 = scmp.eq.s32.totalorder %s16, 0
      %p57 = por %p55, %p56
      %p58 = scmp.ne.s32.totalorder %s50, %s52
      %p59 = scmp.eq.s32.totalorder %s21, 3
      %p60 = por %p58, %p59
      %p61 = scmp.ne.s32.totalorder %s52, %s53
      %p62 = scmp.eq.s32.totalorder %s21, 0
      %p63 = por %p61, %p62
      %p64 = scmp.ne.s32.totalorder %s52, %s53
      %p65 = scmp.eq.s32.totalorder %s22, 3
      %p66 = por %p64, %p65
      %p68 = scmp.ne.s32.totalorder %s53, %s67
      %p69 = scmp.eq.s32.totalorder %s22, 0
      %p70 = por %p68, %p69
      %s72 = sadd.s32 %s71, 1
      %p75 = scmp.eq.s32.totalorder %s16, 3
      %p76 = scmp.ne.s32.totalorder %s71, %s73
      %p77 = scmp.eq.s32.totalorder %s16, 0
      %p78 = por %p76, %p77
      %p79 = scmp.ne.s32.totalorder %s71, %s73
      %p80 = scmp.eq.s32.totalorder %s21, 3
      %p81 = por %p79, %p80
      %p82 = scmp.ne.s32.totalorder %s73, %s74
      %p83 = scmp.eq.s32.totalorder %s21, 0
      %p84 = por %p82, %p83
      %p85 = scmp.ne.s32.totalorder %s73, %s74
      %p86 = scmp.eq.s32.totalorder %s22, 3
      %p87 = por %p85, %p86
      %p89 = scmp.ne.s32.totalorder %s74, %s88
      %p90 = scmp.eq.s32.totalorder %s22, 0
      %p91 = por %p89, %p90
      %s92 = ssub.s32 %s16, %s23
      %p93 = scmp.eq.s32.totalorder %s92, 0
      %s95 = sadd.s32 %s94, 1
      %s96 = scalar_select %p93, %s94, %s95
      %p99 = pneg %p93
      %p100 = scmp.eq.s32.totalorder %s16, 3
      %p101 = por %p99, %p100
      %p102 = scmp.ne.s32.totalorder %s94, %s97
      %p103 = scmp.eq.s32.totalorder %s16, 0
      %p104 = por %p102, %p103
      %p105 = scmp.ne.s32.totalorder %s94, %s97
      %p106 = scmp.eq.s32.totalorder %s21, 3
      %p107 = por %p105, %p106
      %p108 = scmp.ne.s32.totalorder %s97, %s98
      %p109 = scmp.eq.s32.totalorder %s21, 0
      %p110 = por %p108, %p109
      %p111 = scmp.ne.s32.totalorder %s97, %s98
      %p112 = scmp.eq.s32.totalorder %s22, 3
      %p113 = por %p111, %p112
      %p115 = scmp.ne.s32.totalorder %s98, %s114
      %p116 = scmp.eq.s32.totalorder %s22, 0
      %p117 = por %p115, %p116
      %p118 = scmp.le.s32.totalorder 1, %s16
      %p119 = scmp.lt.s32.totalorder %s16, 5
      %p120 = pnand %p118, %p119
      %p121 = pneg %p120
      // Predicated region
      $region9: #{tpu_custom_call.1} parent=5 // pred_check
        _
      $region10: #{tpu_custom_call.1} parent=5 // pred_check_branch
        %123 = sbr.rel (%p120) target = $region12
      $region11: #{tpu_custom_call.1} parent=5 // pred_region
        %s124 = ssub.s32 %s16, 1
        // Predicated region
        $region13: #{tpu_custom_call.1} parent=11 // pred_check
          %p125 = pneg %p63
        $region14: #{tpu_custom_call.1} parent=11 // pred_check_branch
          %127 = sbr.rel (%p125) target = $region16
        $region15: #{tpu_custom_call.1} parent=11 // pred_region
          %s129 = ssub.s32 4096, 4096
          %130 = vsyncadd [#allocation6], %s129
          %s131 = sshll.u32 [#allocation5], 4
          %s132 = int_to_ptr.vmem [resolvable:$true] %s131
          %137 = dma.hbm_to_vmem [thread:$0]  %s1, 4096, %s132, [#allocation6], 256, 256, 16
        $region16: #{tpu_custom_call.1} parent=11 // pred_fallthru
          _
        // Predicated region
        $region17: #{tpu_custom_call.1} parent=11 // pred_check
          %p138 = pneg %p84
        $region18: #{tpu_custom_call.1} parent=11 // pred_check_branch
          %140 = sbr.rel (%p138) target = $region20
        $region19: #{tpu_custom_call.1} parent=11 // pred_region
          _
        $region20: #{tpu_custom_call.1} parent=11 // pred_fallthru
          _
      $region12: #{tpu_custom_call.1} parent=5 // pred_fallthru
        _
      %p141 = scmp.lt.s32.totalorder %s16, 4
      // Predicated region
      $region21: #{tpu_custom_call.1} parent=5 // pred_check
        %p142 = pneg %p141
      $region22: #{tpu_custom_call.1} parent=5 // pred_check_branch
        %144 = sbr.rel (%p142) target = $region24
      $region23: #{tpu_custom_call.1} parent=5 // pred_region
        // Predicated region
        $region25: #{tpu_custom_call.1} parent=23 // pred_check
          %p145 = pneg %p36
        $region26: #{tpu_custom_call.1} parent=23 // pred_check_branch
          %147 = sbr.rel (%p145) target = $region28
        $region27: #{tpu_custom_call.1} parent=23 // pred_region
          %s148 = sand.u32 %s26, 1
          %s149 = scalar_lea.sflag [#allocation3], %s148
          %s150 = sand.u32 %s26, 1
          %s151 = smul.addr %s150, 128
          %s152 = scalar_lea.vmem [#allocation2], %s151
          %s153 = smul.u32 16, %s16
          %s155 = ssub.s32 2048, 2048
          %156 = vsyncadd %s149, %s155
          %s157 = smul.addr %s153, 128
          %s158 = scalar_lea.hbm %s0, %s157
          %s159 = sshll.u32 %s152, 4
          %s160 = int_to_ptr.vmem [resolvable:$true] %s159
          %165 = dma.hbm_to_vmem [thread:$0]  %s158, 2048, %s160, %s149, 128, 128, 8
        $region28: #{tpu_custom_call.1} parent=23 // pred_fallthru
          _
      $region24: #{tpu_custom_call.1} parent=5 // pred_fallthru
        _
      %p166 = scmp.le.s32.totalorder 1, %s16
      %p167 = scmp.lt.s32.totalorder %s16, 5
      %p168 = pnand %p166, %p167
      %p169 = pneg %p168
      // Predicated region
      $region29: #{tpu_custom_call.1} parent=5 // pred_check
        _
      $region30: #{tpu_custom_call.1} parent=5 // pred_check_branch
        %171 = sbr.rel (%p168) target = $region32
      $region31: #{tpu_custom_call.1} parent=5 // pred_region
        %s172 = ssub.s32 %s16, 1
        %s173 = sand.u32 %s29, 1
        %s174 = scalar_lea.sflag [#allocation3], %s173
        %s175 = sand.u32 %s29, 1
        %s176 = smul.addr %s175, 128
        %s177 = scalar_lea.vmem [#allocation2], %s176
        // Predicated region
        $region33: #{tpu_custom_call.1} parent=31 // pred_check
          %p178 = pneg %p42
        $region34: #{tpu_custom_call.1} parent=31 // pred_check_branch
          %180 = sbr.rel (%p178) target = $region36
        $region35: #{tpu_custom_call.1} parent=31 // pred_region
          %181 = dma.done %s174, 2048
        $region36: #{tpu_custom_call.1} parent=31 // pred_fallthru
          _
        // Predicated region
        $region37: #{tpu_custom_call.1} parent=31 // pred_check
          %p182 = pneg %p63
        $region38: #{tpu_custom_call.1} parent=31 // pred_check_branch
          %184 = sbr.rel (%p182) target = $region40
        $region39: #{tpu_custom_call.1} parent=31 // pred_region
          %185 = dma.done [#allocation6], 4096
        $region40: #{tpu_custom_call.1} parent=31 // pred_fallthru
          _
        %s186 = sand.u32 %s29, 1
        %s187 = scalar_lea.sflag [#allocation3], %s186
        %s188 = sand.u32 %s29, 1
        %s189 = smul.addr %s188, 128
        %s190 = scalar_lea.vmem [#allocation2], %s189
        %p191 = pneg %p42
        %p192 = pneg %p39
        %p193 = pneg %p63
        %p194 = pneg %p60
        %p195 = pneg %p84
        %p196 = pneg %p81
        %p197 = pneg %p110
        %p198 = pneg %p107
        %s199 = sand.u32 %s97, 1
        %s200 = scalar_lea.sflag [#allocation4], %s199
        %s201 = sand.u32 %s97, 1
        %s202 = smul.addr %s201, 256
        %s203 = scalar_lea.vmem [#allocation7], %s202
        %s204 = smul.u32 16, %s21
        %s205 = smul.u32 8, %s21
        %v206 = vld [vmem:[%s177] sm:$0xff]
        %v207 = vld [vmem:[%s177 + $0x8] sm:$0xff]
        %v208 = vld [vmem:[%s177 + $0x10] sm:$0xff]
        %v209 = vld [vmem:[%s177 + $0x18] sm:$0xff]
        %v210 = vld [vmem:[%s177 + $0x20] sm:$0xff]
        %v211 = vld [vmem:[%s177 + $0x28] sm:$0xff]
        %v212 = vld [vmem:[%s177 + $0x30] sm:$0xff]
        %v213 = vld [vmem:[%s177 + $0x38] sm:$0xff]
        %v214 = vld [vmem:[%s177 + $0x40] sm:$0xff]
        %v215 = vld [vmem:[%s177 + $0x48] sm:$0xff]
        %v216 = vld [vmem:[%s177 + $0x50] sm:$0xff]
        %v217 = vld [vmem:[%s177 + $0x58] sm:$0xff]
        %v218 = vld [vmem:[%s177 + $0x60] sm:$0xff]
        %v219 = vld [vmem:[%s177 + $0x68] sm:$0xff]
        %v220 = vld [vmem:[%s177 + $0x70] sm:$0xff]
        %v221 = vld [vmem:[%s177 + $0x78] sm:$0xff]
        %v222 = vld [vmem:[#allocation5] sm:$0xff]
        %v223 = vld [vmem:[#allocation5 + $0x10] sm:$0xff]
        %v224 = vld [vmem:[#allocation5 + $0x20] sm:$0xff]
        %v225 = vld [vmem:[#allocation5 + $0x30] sm:$0xff]
        %v226 = vld [vmem:[#allocation5 + $0x40] sm:$0xff]
        %v227 = vld [vmem:[#allocation5 + $0x50] sm:$0xff]
        %v228 = vld [vmem:[#allocation5 + $0x60] sm:$0xff]
        %v229 = vld [vmem:[#allocation5 + $0x70] sm:$0xff]
        %v230 = vld [vmem:[#allocation5 + $0x80] sm:$0xff]
        %v231 = vld [vmem:[#allocation5 + $0x90] sm:$0xff]
        %v232 = vld [vmem:[#allocation5 + $0xa0] sm:$0xff]
        %v233 = vld [vmem:[#allocation5 + $0xb0] sm:$0xff]
        %v234 = vld [vmem:[#allocation5 + $0xc0] sm:$0xff]
        %v235 = vld [vmem:[#allocation5 + $0xd0] sm:$0xff]
        %v236 = vld [vmem:[#allocation5 + $0xe0] sm:$0xff]
        %v237 = vld [vmem:[#allocation5 + $0xf0] sm:$0xff]
        %v238 = vld [vmem:[%s2] sm:$0x1]
        %v240 = vlaneseq
        %v241 = vshrl.u32 %v240, 7
        %v242 = vsub.s32 0, %v241
        %v243 = vrot.slane %v238, %v242
        %245 = vmatprep.subr.mxu0 0.0
        %246 = vmatpush1.msra.mxu0 %v222
        %247 = vmatprep.subr.mxu0 0.0
        %248 = vmatpush1.msra.mxu0 %v223
        %249 = vmatprep.subr.mxu0 0.0
        %250 = vmatpush1.msra.mxu0 %v224
        %251 = vmatprep.subr.mxu0 0.0
        %252 = vmatpush1.msra.mxu0 %v225
        %253 = vmatprep.subr.mxu0 0.0
        %254 = vmatpush1.msra.mxu0 %v226
        %255 = vmatprep.subr.mxu0 0.0
        %256 = vmatpush1.msra.mxu0 %v227
        %257 = vmatprep.subr.mxu0 0.0
        %258 = vmatpush1.msra.mxu0 %v228
        %259 = vmatprep.subr.mxu0 0.0
        %260 = vmatpush1.msra.mxu0 %v229
        %261 = vmatprep.subr.mxu0 0.0
        %262 = vmatpush1.msra.mxu0 %v230
        %263 = vmatprep.subr.mxu0 0.0
        %264 = vmatpush1.msra.mxu0 %v231
        %265 = vmatprep.subr.mxu0 0.0
        %266 = vmatpush1.msra.mxu0 %v232
        %267 = vmatprep.subr.mxu0 0.0
        %268 = vmatpush1.msra.mxu0 %v233
        %269 = vmatprep.subr.mxu0 0.0
        %270 = vmatpush1.msra.mxu0 %v234
        %271 = vmatprep.subr.mxu0 0.0
        %272 = vmatpush1.msra.mxu0 %v235
        %273 = vmatprep.subr.mxu0 0.0
        %274 = vmatpush1.msra.mxu0 %v236
        %275 = vmatprep.subr.mxu0 0.0
        %276 = vmatpush1.msra.mxu0 %v237
        %277 = vmatprep.subr.mxu0 0.0
        %278 = vmatpush1.msra.mxu0 0.0
        %279 = vmatprep.subr.mxu0 0.0
        %280 = vmatpush1.msra.mxu0 0.0
        %281 = vmatprep.subr.mxu0 0.0
        %282 = vmatpush1.msra.mxu0 0.0
        %283 = vmatprep.subr.mxu0 0.0
        %284 = vmatpush1.msra.mxu0 0.0
        %285 = vmatprep.subr.mxu0 0.0
        %286 = vmatpush1.msra.mxu0 0.0
        %287 = vmatprep.subr.mxu0 0.0
        %288 = vmatpush1.msra.mxu0 0.0
        %289 = vmatprep.subr.mxu0 0.0
        %290 = vmatpush1.msra.mxu0 0.0
        %291 = vmatprep.subr.mxu0 0.0
        %292 = vmatpush1.msra.mxu0 0.0
        %293 = vmatprep.subr.mxu0 0.0
        %294 = vmatpush1.msra.mxu0 0.0
        %295 = vmatprep.subr.mxu0 0.0
        %296 = vmatpush1.msra.mxu0 0.0
        %297 = vmatprep.subr.mxu0 0.0
        %298 = vmatpush1.msra.mxu0 0.0
        %299 = vmatprep.subr.mxu0 0.0
        %300 = vmatpush1.msra.mxu0 0.0
        %301 = vmatprep.subr.mxu0 0.0
        %302 = vmatpush1.msra.mxu0 0.0
        %303 = vmatprep.subr.mxu0 0.0
        %304 = vmatpush1.msra.mxu0 0.0
        %305 = vmatprep.subr.mxu0 0.0
        %306 = vmatpush1.msra.mxu0 0.0
        %307 = vmatprep.subr.mxu0 0.0
        %308 = vmatpush1.msra.mxu0 0.0
        %309 = vmatprep.mubr.f32.mxu0 0.0
        %310 = vmatmul.mubr.f32.gmra.mrb[0].mxu0 %v206
        %v311 = vpop.f32.mrb[0].mxu0
        %v312 = vadd.f32 %v243, %v311
        %v313 = vpop.f32.mrb[0].mxu0
        %314 = vmatprep.mubr.f32.mxu0 0.0
        %315 = vmatmul.mubr.f32.gmra.mrb[0].mxu0 %v207
        %v316 = vpop.f32.mrb[0].mxu0
        %v317 = vadd.f32 %v243, %v316
        %v318 = vpop.f32.mrb[0].mxu0
        %319 = vmatprep.mubr.f32.mxu0 0.0
        %320 = vmatmul.mubr.f32.gmra.mrb[0].mxu0 %v208
        %v321 = vpop.f32.mrb[0].mxu0
        %v322 = vadd.f32 %v243, %v321
        %v323 = vpop.f32.mrb[0].mxu0
        %324 = vmatprep.mubr.f32.mxu0 0.0
        %325 = vmatmul.mubr.f32.gmra.mrb[0].mxu0 %v209
        %v326 = vpop.f32.mrb[0].mxu0
        %v327 = vadd.f32 %v243, %v326
        %v328 = vpop.f32.mrb[0].mxu0
        %329 = vmatprep.mubr.f32.mxu0 0.0
        %330 = vmatmul.mubr.f32.gmra.mrb[0].mxu0 %v210
        %v331 = vpop.f32.mrb[0].mxu0
        %v332 = vadd.f32 %v243, %v331
        %v333 = vpop.f32.mrb[0].mxu0
        %334 = vmatprep.mubr.f32.mxu0 0.0
        %335 = vmatmul.mubr.f32.gmra.mrb[0].mxu0 %v211
        %v336 = vpop.f32.mrb[0].mxu0
        %v337 = vadd.f32 %v243, %v336
        %v338 = vpop.f32.mrb[0].mxu0
        %339 = vmatprep.mubr.f32.mxu0 0.0
        %340 = vmatmul.mubr.f32.gmra.mrb[0].mxu0 %v212
        %v341 = vpop.f32.mrb[0].mxu0
        %v342 = vadd.f32 %v243, %v341
        %v343 = vpop.f32.mrb[0].mxu0
        %344 = vmatprep.mubr.f32.mxu0 0.0
        %345 = vmatmul.mubr.f32.gmra.mrb[0].mxu0 %v213
        %v346 = vpop.f32.mrb[0].mxu0
        %v347 = vadd.f32 %v243, %v346
        %v348 = vpop.f32.mrb[0].mxu0
        %349 = vmatprep.mubr.f32.mxu0 0.0
        %350 = vmatmul.mubr.f32.gmra.mrb[0].mxu0 %v214
        %v351 = vpop.f32.mrb[0].mxu0
        %v352 = vadd.f32 %v243, %v351
        %v353 = vpop.f32.mrb[0].mxu0
        %354 = vmatprep.mubr.f32.mxu0 0.0
        %355 = vmatmul.mubr.f32.gmra.mrb[0].mxu0 %v215
        %v356 = vpop.f32.mrb[0].mxu0
        %v357 = vadd.f32 %v243, %v356
        %v358 = vpop.f32.mrb[0].mxu0
        %359 = vmatprep.mubr.f32.mxu0 0.0
        %360 = vmatmul.mubr.f32.gmra.mrb[0].mxu0 %v216
        %v361 = vpop.f32.mrb[0].mxu0
        %v362 = vadd.f32 %v243, %v361
        %v363 = vpop.f32.mrb[0].mxu0
        %364 = vmatprep.mubr.f32.mxu0 0.0
        %365 = vmatmul.mubr.f32.gmra.mrb[0].mxu0 %v217
        %v366 = vpop.f32.mrb[0].mxu0
        %v367 = vadd.f32 %v243, %v366
        %v368 = vpop.f32.mrb[0].mxu0
        %369 = vmatprep.mubr.f32.mxu0 0.0
        %370 = vmatmul.mubr.f32.gmra.mrb[0].mxu0 %v218
        %v371 = vpop.f32.mrb[0].mxu0
        %v372 = vadd.f32 %v243, %v371
        %v373 = vpop.f32.mrb[0].mxu0
        %374 = vmatprep.mubr.f32.mxu0 0.0
        %375 = vmatmul.mubr.f32.gmra.mrb[0].mxu0 %v219
        %v376 = vpop.f32.mrb[0].mxu0
        %v377 = vadd.f32 %v243, %v376
        %v378 = vpop.f32.mrb[0].mxu0
        %379 = vmatprep.mubr.f32.mxu0 0.0
        %380 = vmatmul.mubr.f32.gmra.mrb[0].mxu0 %v220
        %v381 = vpop.f32.mrb[0].mxu0
        %v382 = vadd.f32 %v243, %v381
        %v383 = vpop.f32.mrb[0].mxu0
        %384 = vmatprep.mubr.f32.mxu0 0.0
        %385 = vmatmul.mubr.f32.gmra.mrb[0].mxu0 %v221
        %v386 = vpop.f32.mrb[0].mxu0
        %v387 = vadd.f32 %v243, %v386
        %v388 = vpop.f32.mrb[0].mxu0
        %389 = vdwg.mxu0
        %390 = vst [vmem:[%s203] sm:$0xff] %v312
        %391 = vst [vmem:[%s203 + $0x8] sm:$0xff] %v317
        %392 = vst [vmem:[%s203 + $0x20] sm:$0xff] %v322
        %393 = vst [vmem:[%s203 + $0x28] sm:$0xff] %v327
        %394 = vst [vmem:[%s203 + $0x40] sm:$0xff] %v332
        %395 = vst [vmem:[%s203 + $0x48] sm:$0xff] %v337
        %396 = vst [vmem:[%s203 + $0x60] sm:$0xff] %v342
        %397 = vst [vmem:[%s203 + $0x68] sm:$0xff] %v347
        %398 = vst [vmem:[%s203 + $0x80] sm:$0xff] %v352
        %399 = vst [vmem:[%s203 + $0x88] sm:$0xff] %v357
        %400 = vst [vmem:[%s203 + $0xa0] sm:$0xff] %v362
        %401 = vst [vmem:[%s203 + $0xa8] sm:$0xff] %v367
        %402 = vst [vmem:[%s203 + $0xc0] sm:$0xff] %v372
        %403 = vst [vmem:[%s203 + $0xc8] sm:$0xff] %v377
        %404 = vst [vmem:[%s203 + $0xe0] sm:$0xff] %v382
        %405 = vst [vmem:[%s203 + $0xe8] sm:$0xff] %v387
        %v406 = vld [vmem:[#allocation5 + $0x8] sm:$0xff]
        %v407 = vld [vmem:[#allocation5 + $0x18] sm:$0xff]
        %v408 = vld [vmem:[#allocation5 + $0x28] sm:$0xff]
        %v409 = vld [vmem:[#allocation5 + $0x38] sm:$0xff]
        %v410 = vld [vmem:[#allocation5 + $0x48] sm:$0xff]
        %v411 = vld [vmem:[#allocation5 + $0x58] sm:$0xff]
        %v412 = vld [vmem:[#allocation5 + $0x68] sm:$0xff]
        %v413 = vld [vmem:[#allocation5 + $0x78] sm:$0xff]
        %v414 = vld [vmem:[#allocation5 + $0x88] sm:$0xff]
        %v415 = vld [vmem:[#allocation5 + $0x98] sm:$0xff]
        %v416 = vld [vmem:[#allocation5 + $0xa8] sm:$0xff]
        %v417 = vld [vmem:[#allocation5 + $0xb8] sm:$0xff]
        %v418 = vld [vmem:[#allocation5 + $0xc8] sm:$0xff]
        %v419 = vld [vmem:[#allocation5 + $0xd8] sm:$0xff]
        %v420 = vld [vmem:[#allocation5 + $0xe8] sm:$0xff]
        %v421 = vld [vmem:[#allocation5 + $0xf8] sm:$0xff]
        %v422 = vld [vmem:[%s2 + $0x1] sm:$0x1]
        %v424 = vlaneseq
        %v425 = vshrl.u32 %v424, 7
        %v426 = vsub.s32 0, %v425
        %v427 = vrot.slane %v422, %v426
        %429 = vmatprep.subr.mxu0 0.0
        %430 = vmatpush1.msra.mxu0 %v406
        %431 = vmatprep.subr.mxu0 0.0
        %432 = vmatpush1.msra.mxu0 %v407
        %433 = vmatprep.subr.mxu0 0.0
        %434 = vmatpush1.msra.mxu0 %v408
        %435 = vmatprep.subr.mxu0 0.0
        %436 = vmatpush1.msra.mxu0 %v409
        %437 = vmatprep.subr.mxu0 0.0
        %438 = vmatpush1.msra.mxu0 %v410
        %439 = vmatprep.subr.mxu0 0.0
        %440 = vmatpush1.msra.mxu0 %v411
        %441 = vmatprep.subr.mxu0 0.0
        %442 = vmatpush1.msra.mxu0 %v412
        %443 = vmatprep.subr.mxu0 0.0
        %444 = vmatpush1.msra.mxu0 %v413
        %445 = vmatprep.subr.mxu0 0.0
        %446 = vmatpush1.msra.mxu0 %v414
        %447 = vmatprep.subr.mxu0 0.0
        %448 = vmatpush1.msra.mxu0 %v415
        %449 = vmatprep.subr.mxu0 0.0
        %450 = vmatpush1.msra.mxu0 %v416
        %451 = vmatprep.subr.mxu0 0.0
        %452 = vmatpush1.msra.mxu0 %v417
        %453 = vmatprep.subr.mxu0 0.0
        %454 = vmatpush1.msra.mxu0 %v418
        %455 = vmatprep.subr.mxu0 0.0
        %456 = vmatpush1.msra.mxu0 %v419
        %457 = vmatprep.subr.mxu0 0.0
        %458 = vmatpush1.msra.mxu0 %v420
        %459 = vmatprep.subr.mxu0 0.0
        %460 = vmatpush1.msra.mxu0 %v421
        %461 = vmatprep.subr.mxu0 0.0
        %462 = vmatpush1.msra.mxu0 0.0
        %463 = vmatprep.subr.mxu0 0.0
        %464 = vmatpush1.msra.mxu0 0.0
        %465 = vmatprep.subr.mxu0 0.0
        %466 = vmatpush1.msra.mxu0 0.0
        %467 = vmatprep.subr.mxu0 0.0
        %468 = vmatpush1.msra.mxu0 0.0
        %469 = vmatprep.subr.mxu0 0.0
        %470 = vmatpush1.msra.mxu0 0.0
        %471 = vmatprep.subr.mxu0 0.0
        %472 = vmatpush1.msra.mxu0 0.0
        %473 = vmatprep.subr.mxu0 0.0
        %474 = vmatpush1.msra.mxu0 0.0
        %475 = vmatprep.subr.mxu0 0.0
        %476 = vmatpush1.msra.mxu0 0.0
        %477 = vmatprep.subr.mxu0 0.0
        %478 = vmatpush1.msra.mxu0 0.0
        %479 = vmatprep.subr.mxu0 0.0
        %480 = vmatpush1.msra.mxu0 0.0
        %481 = vmatprep.subr.mxu0 0.0
        %482 = vmatpush1.msra.mxu0 0.0
        %483 = vmatprep.subr.mxu0 0.0
        %484 = vmatpush1.msra.mxu0 0.0
        %485 = vmatprep.subr.mxu0 0.0
        %486 = vmatpush1.msra.mxu0 0.0
        %487 = vmatprep.subr.mxu0 0.0
        %488 = vmatpush1.msra.mxu0 0.0
        %489 = vmatprep.subr.mxu0 0.0
        %490 = vmatpush1.msra.mxu0 0.0
        %491 = vmatprep.subr.mxu0 0.0
        %492 = vmatpush1.msra.mxu0 0.0
        %493 = vmatprep.mubr.f32.mxu0 0.0
        %494 = vmatmul.mubr.f32.gmra.mrb[0].mxu0 %v206
        %v495 = vpop.f32.mrb[0].mxu0
        %v496 = vadd.f32 %v427, %v495
        %v497 = vpop.f32.mrb[0].mxu0
        %498 = vmatprep.mubr.f32.mxu0 0.0
        %499 = vmatmul.mubr.f32.gmra.mrb[0].mxu0 %v207
        %v500 = vpop.f32.mrb[0].mxu0
        %v501 = vadd.f32 %v427, %v500
        %v502 = vpop.f32.mrb[0].mxu0
        %503 = vmatprep.mubr.f32.mxu0 0.0
        %504 = vmatmul.mubr.f32.gmra.mrb[0].mxu0 %v208
        %v505 = vpop.f32.mrb[0].mxu0
        %v506 = vadd.f32 %v427, %v505
        %v507 = vpop.f32.mrb[0].mxu0
        %508 = vmatprep.mubr.f32.mxu0 0.0
        %509 = vmatmul.mubr.f32.gmra.mrb[0].mxu0 %v209
        %v510 = vpop.f32.mrb[0].mxu0
        %v511 = vadd.f32 %v427, %v510
        %v512 = vpop.f32.mrb[0].mxu0
        %513 = vmatprep.mubr.f32.mxu0 0.0
        %514 = vmatmul.mubr.f32.gmra.mrb[0].mxu0 %v210
        %v515 = vpop.f32.mrb[0].mxu0
        %v516 = vadd.f32 %v427, %v515
        %v517 = vpop.f32.mrb[0].mxu0
        %518 = vmatprep.mubr.f32.mxu0 0.0
        %519 = vmatmul.mubr.f32.gmra.mrb[0].mxu0 %v211
        %v520 = vpop.f32.mrb[0].mxu0
        %v521 = vadd.f32 %v427, %v520
        %v522 = vpop.f32.mrb[0].mxu0
        %523 = vmatprep.mubr.f32.mxu0 0.0
        %524 = vmatmul.mubr.f32.gmra.mrb[0].mxu0 %v212
        %v525 = vpop.f32.mrb[0].mxu0
        %v526 = vadd.f32 %v427, %v525
        %v527 = vpop.f32.mrb[0].mxu0
        %528 = vmatprep.mubr.f32.mxu0 0.0
        %529 = vmatmul.mubr.f32.gmra.mrb[0].mxu0 %v213
        %v530 = vpop.f32.mrb[0].mxu0
        %v531 = vadd.f32 %v427, %v530
        %v532 = vpop.f32.mrb[0].mxu0
        %533 = vmatprep.mubr.f32.mxu0 0.0
        %534 = vmatmul.mubr.f32.gmra.mrb[0].mxu0 %v214
        %v535 = vpop.f32.mrb[0].mxu0
        %v536 = vadd.f32 %v427, %v535
        %v537 = vpop.f32.mrb[0].mxu0
        %538 = vmatprep.mubr.f32.mxu0 0.0
        %539 = vmatmul.mubr.f32.gmra.mrb[0].mxu0 %v215
        %v540 = vpop.f32.mrb[0].mxu0
        %v541 = vadd.f32 %v427, %v540
        %v542 = vpop.f32.mrb[0].mxu0
        %543 = vmatprep.mubr.f32.mxu0 0.0
        %544 = vmatmul.mubr.f32.gmra.mrb[0].mxu0 %v216
        %v545 = vpop.f32.mrb[0].mxu0
        %v546 = vadd.f32 %v427, %v545
        %v547 = vpop.f32.mrb[0].mxu0
        %548 = vmatprep.mubr.f32.mxu0 0.0
        %549 = vmatmul.mubr.f32.gmra.mrb[0].mxu0 %v217
        %v550 = vpop.f32.mrb[0].mxu0
        %v551 = vadd.f32 %v427, %v550
        %v552 = vpop.f32.mrb[0].mxu0
        %553 = vmatprep.mubr.f32.mxu0 0.0
        %554 = vmatmul.mubr.f32.gmra.mrb[0].mxu0 %v218
        %v555 = vpop.f32.mrb[0].mxu0
        %v556 = vadd.f32 %v427, %v555
        %v557 = vpop.f32.mrb[0].mxu0
        %558 = vmatprep.mubr.f32.mxu0 0.0
        %559 = vmatmul.mubr.f32.gmra.mrb[0].mxu0 %v219
        %v560 = vpop.f32.mrb[0].mxu0
        %v561 = vadd.f32 %v427, %v560
        %v562 = vpop.f32.mrb[0].mxu0
        %563 = vmatprep.mubr.f32.mxu0 0.0
        %564 = vmatmul.mubr.f32.gmra.mrb[0].mxu0 %v220
        %v565 = vpop.f32.mrb[0].mxu0
        %v566 = vadd.f32 %v427, %v565
        %v567 = vpop.f32.mrb[0].mxu0
        %568 = vmatprep.mubr.f32.mxu0 0.0
        %569 = vmatmul.mubr.f32.gmra.mrb[0].mxu0 %v221
        %v570 = vpop.f32.mrb[0].mxu0
        %v571 = vadd.f32 %v427, %v570
        %v572 = vpop.f32.mrb[0].mxu0
        %573 = vdwg.mxu0
        %s574 = scalar_lea.vmem %s203, 16 [#allocation7]
        %575 = vst [vmem:[%s574] sm:$0xff] %v496
        %576 = vst [vmem:[%s574 + $0x8] sm:$0xff] %v501
        %577 = vst [vmem:[%s574 + $0x20] sm:$0xff] %v506
        %578 = vst [vmem:[%s574 + $0x28] sm:$0xff] %v511
        %579 = vst [vmem:[%s574 + $0x40] sm:$0xff] %v516
        %580 = vst [vmem:[%s574 + $0x48] sm:$0xff] %v521
        %581 = vst [vmem:[%s574 + $0x60] sm:$0xff] %v526
        %582 = vst [vmem:[%s574 + $0x68] sm:$0xff] %v531
        %583 = vst [vmem:[%s574 + $0x80] sm:$0xff] %v536
        %584 = vst [vmem:[%s574 + $0x88] sm:$0xff] %v541
        %585 = vst [vmem:[%s574 + $0xa0] sm:$0xff] %v546
        %586 = vst [vmem:[%s574 + $0xa8] sm:$0xff] %v551
        %587 = vst [vmem:[%s574 + $0xc0] sm:$0xff] %v556
        %588 = vst [vmem:[%s574 + $0xc8] sm:$0xff] %v561
        %589 = vst [vmem:[%s574 + $0xe0] sm:$0xff] %v566
        %590 = vst [vmem:[%s574 + $0xe8] sm:$0xff] %v571
        %s591 = sand.u32 %s97, 1
        %s592 = scalar_lea.sflag [#allocation4], %s591
        %s593 = sand.u32 %s97, 1
        %s594 = smul.addr %s593, 256
        %s595 = scalar_lea.vmem [#allocation7], %s594
        // Predicated region
        $region41: #{tpu_custom_call.1} parent=31 // pred_check
          %p596 = pneg %p107
        $region42: #{tpu_custom_call.1} parent=31 // pred_check_branch
          %598 = sbr.rel (%p596) target = $region44
        $region43: #{tpu_custom_call.1} parent=31 // pred_region
          %s599 = smul.u32 8, %s21
          %s601 = ssub.s32 4096, 4096
          %602 = vsyncadd %s592, %s601
          %s603 = smul.addr %s599, 4
          %s604 = smul.addr %s603, 128
          %s605 = scalar_lea.hbm %s3, %s604
          %s606 = sshll.u32 %s595, 4
          %s607 = int_to_ptr.vmem [resolvable:$true] %s606
          %612 = dma.vmem_to_hbm [thread:$0]  %s607, 4096, %s605, %s592, 128, 128, 8
        $region44: #{tpu_custom_call.1} parent=31 // pred_fallthru
          _
      $region32: #{tpu_custom_call.1} parent=5 // pred_fallthru
        _
      %p613 = scmp.le.s32.totalorder 2, %s16
      // Predicated region
      $region45: #{tpu_custom_call.1} parent=5 // pred_check
        %p614 = pneg %p613
      $region46: #{tpu_custom_call.1} parent=5 // pred_check_branch
        %616 = sbr.rel (%p614) target = $region48
      $region47: #{tpu_custom_call.1} parent=5 // pred_region
        %s617 = ssub.s32 %s16, 2
        // Predicated region
        $region49: #{tpu_custom_call.1} parent=47 // pred_check
          %p618 = pneg %p113
        $region50: #{tpu_custom_call.1} parent=47 // pred_check_branch
          %620 = sbr.rel (%p618) target = $region52
        $region51: #{tpu_custom_call.1} parent=47 // pred_region
          %s621 = sand.u32 %s98, 1
          %s622 = scalar_lea.sflag [#allocation4], %s621
          %s623 = sand.u32 %s98, 1
          %s624 = smul.addr %s623, 256
          %s625 = scalar_lea.vmem [#allocation7], %s624
          %626 = dma.done %s622, 4096
        $region52: #{tpu_custom_call.1} parent=47 // pred_fallthru
          _
      $region48: #{tpu_custom_call.1} parent=5 // pred_fallthru
        _
    $region6: #{tpu_custom_call.1} parent=1 // loop_footer
      %s20 = sadd.s32 1, %s16
    $region7: #{tpu_custom_call.1} parent=1 // loop_footer_branch
      %15 = sbr.rel target = $region3
    $region8: #{tpu_custom_call.1} parent=1 // loop_exit
      _
    %627 = vsyncpa [#allocation3], 1
    %s628 = scalar_lea.sflag [#allocation3], 1
    %629 = vsyncpa %s628, 1
    %630 = vsyncpa [#allocation6], 1
    %631 = vsyncpa [#allocation4], 1
    %s632 = scalar_lea.sflag [#allocation4], 1
    %633 = vsyncpa %s632, 1

</llo_original>
